<compile_context>
chip_gen: v5e
topology: v5e:2x2
jax: 0.10.0
libtpu: 0.0.40
codegen_flags: <defaults>
</compile_context>

<pallas_src>
import jax
import jax.numpy as jnp
from jax import lax
from jax.experimental import pallas as pl
from jax.experimental.pallas import tpu as pltpu

_LANE = 128


def _min_fill(dtype):
    """A value that can never win a max against real data of `dtype`."""
    dtype = jnp.dtype(dtype)
    if jnp.issubdtype(dtype, jnp.floating):
        return float("-inf")
    if dtype == jnp.bool_:
        return False
    return int(jnp.iinfo(dtype).min)


def _gmp_kernel_single(x_ref, o_ref):
    # x_ref: (1, C, rows_tile, 128) -> o_ref: (1, 1, rows_tile, 128)
    # Channel axis is off the trailing (sublane, lane) dims, so this reduce is
    # an elementwise VPU max across channel slabs (no XLU).
    o_ref[...] = jnp.max(x_ref[...], axis=1, keepdims=True)


def _make_reduce_kernel(c_rem, fill):
    """Kernel for the C-tiled (3-axis grid) path.

    c_rem = C % tc (0 means tc divides C, so no tail masking is needed).
    The output block is VMEM-resident across the trailing "arbitrary" axis.
    """

    def _block_max(x):
        return jnp.max(x, axis=1, keepdims=True)

    def kernel(x_ref, o_ref):
        c = pl.program_id(2)
        last = pl.num_programs(2) - 1

        @pl.when(c == 0)
        def _init():
            o_ref[...] = _block_max(x_ref[...])

        if c_rem == 0:
            @pl.when(c != 0)
            def _accum():
                o_ref[...] = jnp.maximum(o_ref[...], _block_max(x_ref[...]))
        else:
            @pl.when((c != 0) & (c != last))
            def _accum():
                o_ref[...] = jnp.maximum(o_ref[...], _block_max(x_ref[...]))

            # Ragged last channel tile: tail channels of the block are
            # undefined (Pallas only DMAs the in-bounds region, so no HBM
            # bandwidth is wasted on them); mask so they can never win.
            @pl.when(c == last)  # last != 0 here (>= 2 channel tiles)
            def _accum_tail():
                x = x_ref[...]
                ch = lax.broadcasted_iota(jnp.int32, x.shape, 1)
                x = jnp.where(ch < c_rem, x, jnp.asarray(fill, dtype=x.dtype))
                o_ref[...] = jnp.maximum(o_ref[...], _block_max(x))

    return kernel


def global_max_pool(x, *, target_block_bytes=None, vmem_limit_bytes=None):
    """Max over dim=1 with keepdim: (B, C, H, W) -> (B, 1, H, W)."""
    B, C, H, W = x.shape
    S = H * W
    dtype = x.dtype
    itemsize = jnp.dtype(dtype).itemsize

    # ---- generation-aware sizing --------------------------------------------
    try:
        vmem_cap = int(pltpu.get_tpu_info().vmem_capacity_bytes)
    except Exception:  # interpret mode / query unavailable -> conservative v7x
        vmem_cap = 64 * 1024 * 1024
    if vmem_limit_bytes is None:
        vmem_limit_bytes = max(32 * 1024 * 1024, (vmem_cap * 3) // 4)
    if target_block_bytes is None:
        # ~8 MiB blocks on v7x (64 MiB VMEM), ~16 MiB on v5e/v6e (128 MiB).
        target_block_bytes = max(4 * 1024 * 1024,
                                 min(16 * 1024 * 1024, vmem_cap // 8))

    # ---- lane-dense spatial layout ------------------------------------------
    # Packed sublane multiple for the dtype (8 f32, 16 bf16, 32 int8).
    sublane_mult = max(8, 32 // itemsize)
    n_rows = pl.cdiv(S, _LANE)
    pad_s = n_rows * _LANE - S

    xf = x.reshape(B, C, S)
    if pad_s:
        # Spatial pad value is irrelevant: padded lanes are sliced off below.
        xf = jnp.pad(xf, ((0, 0), (0, 0), (0, pad_s)))
    x4 = xf.reshape(B, C, n_rows, _LANE)

    # ---- tile selection -------------------------------------------------------
    max_elems = max(target_block_bytes // itemsize, sublane_mult * _LANE)
    # Prefer the full spatial extent (one contiguous HBM chunk per channel),
    # capped at 32 sublane-groups so the reduce accumulator stays comfortably
    # inside the 64-vreg budget.  Then grow the channel tile to fill the block.
    rows_cap = 32 * sublane_mult
    rows_tile = min(n_rows, rows_cap)
    tc = max(1, min(C, max_elems // (rows_tile * _LANE)))

    n_sp = pl.cdiv(n_rows, rows_tile)
    # v7x megacore: guarantee >= 2 "parallel" grid iterations when possible.
    if B == 1 and n_sp == 1 and n_rows >= 2 * sublane_mult:
        rows_tile = pl.cdiv(pl.cdiv(n_rows, 2), sublane_mult) * sublane_mult
        n_sp = pl.cdiv(n_rows, rows_tile)

    fill = _min_fill(dtype)

    cost = pl.CostEstimate(
        flops=B * C * S,                       # one compare per input element
        transcendentals=0,
        bytes_accessed=(B * C * S + B * S) * itemsize,
    )

    if tc >= C:
        # ---- single channel tile: 2-axis, fully "parallel" grid --------------
        tc = C
        grid = (B, n_sp)
        kernel = _gmp_kernel_single
        in_specs = [pl.BlockSpec((1, tc, rows_tile, _LANE),
                                 lambda b, s: (b, 0, s, 0))]
        out_specs = pl.BlockSpec((1, 1, rows_tile, _LANE),
                                 lambda b, s: (b, 0, s, 0))
        dim_sem = ("parallel", "parallel")
    else:
        # ---- C split across a trailing "arbitrary" reduction axis ------------
        n_c = pl.cdiv(C, tc)
        c_rem = C % tc            # ragged last channel tile masked in-kernel
        grid = (B, n_sp, n_c)
        kernel = _make_reduce_kernel(c_rem, fill)
        in_specs = [pl.BlockSpec((1, tc, rows_tile, _LANE),
                                 lambda b, s, c: (b, c, s, 0))]
        # Output block constant across C -> VMEM-resident accumulator.
        out_specs = pl.BlockSpec((1, 1, rows_tile, _LANE),
                                 lambda b, s, c: (b, 0, s, 0))
        dim_sem = ("parallel", "parallel", "arbitrary")

    out4 = pl.pallas_call(
        kernel,
        out_shape=jax.ShapeDtypeStruct((B, 1, n_rows, _LANE), dtype),
        grid_spec=pltpu.PrefetchScalarGridSpec(
            num_scalar_prefetch=0,
            grid=grid,
            in_specs=in_specs,
            out_specs=out_specs,
        ),
        compiler_params=pltpu.CompilerParams(
            dimension_semantics=dim_sem,
            vmem_limit_bytes=int(vmem_limit_bytes),
        ),
        cost_estimate=cost,
    )(x4)

    out = out4.reshape(B, 1, n_rows * _LANE)
    if pad_s:
        out = out[:, :, :S]
    return out.reshape(B, 1, H, W)


if __name__ == "__main__":
    # Toy shape from the module spec: (B, C, H, W) = (2, 4, 16, 16).
    x = jax.random.normal(jax.random.PRNGKey(0), (2, 4, 16, 16), dtype=jnp.float32)
    out = jax.block_until_ready(global_max_pool(x))
    ref = jnp.max(x, axis=1, keepdims=True)
    assert out.shape == (2, 1, 16, 16), out.shape
    assert jnp.allclose(out, ref), "mismatch vs reference (toy shape)"

    # Ragged spatial size (H*W = 63 -> padded to one 128-lane row).
    x2 = jax.random.normal(jax.random.PRNGKey(1), (3, 5, 7, 9), dtype=jnp.float32)
    out2 = jax.block_until_ready(global_max_pool(x2))
    ref2 = jnp.max(x2, axis=1, keepdims=True)
    assert out2.shape == (3, 1, 7, 9), out2.shape
    assert jnp.allclose(out2, ref2), "mismatch vs reference (spatial-padded)"

    # Force the C-tiled reduction path with a ragged last channel tile (13 % 4)
    # by shrinking the block budget (exercises in-kernel tail masking, no pad).
    x3 = jax.random.normal(jax.random.PRNGKey(2), (1, 13, 20, 20), dtype=jnp.float32)
    out3 = jax.block_until_ready(global_max_pool(x3, target_block_bytes=8 * 1024))
    ref3 = jnp.max(x3, axis=1, keepdims=True)
    assert out3.shape == (1, 1, 20, 20), out3.shape
    assert jnp.allclose(out3, ref3), "mismatch vs reference (channel-tiled + mask)"

    # B == 1 megacore path: spatial axis split into >= 2 parallel tiles.
    x4 = jax.random.normal(jax.random.PRNGKey(3), (1, 3, 32, 64), dtype=jnp.float32)
    out4 = jax.block_until_ready(global_max_pool(x4))
    ref4 = jnp.max(x4, axis=1, keepdims=True)
    assert out4.shape == (1, 1, 32, 64), out4.shape
    assert jnp.allclose(out4, ref4), "mismatch vs reference (megacore split)"

    print("KERNEL_OK")
</pallas_src>

<mosaic_0001>
module attributes {stable_mosaic.version = 11 : i64} {
  func.func @_gmp_kernel_single(%arg0: i32, %arg1: i32, %arg2: memref<1x4x2x128xf32, #tpu.memory_space<vmem>>, %arg3: memref<1x1x2x128xf32, #tpu.memory_space<vmem>>) attributes {dimension_semantics = [#tpu.dimension_semantics<parallel>, #tpu.dimension_semantics<parallel>], iteration_bounds = array<i64: 2, 1>, scalar_prefetch = 0 : i64, scratch_operands = 0 : i64, tpu.core_type = #tpu.core_type<tc>, window_params = [{transform_indices = @transform_0, window_bounds = array<i64: 1, 4, 2, 128>}, {transform_indices = @transform_1, window_bounds = array<i64: 1, 1, 2, 128>}]} {
    %c0 = arith.constant 0 : index
    %c0_0 = arith.constant 0 : index
    %c0_1 = arith.constant 0 : index
    %c0_2 = arith.constant 0 : index
    %0 = vector.load %arg2[%c0, %c0_0, %c0_1, %c0_2] : memref<1x4x2x128xf32, #tpu.memory_space<vmem>>, vector<1x4x2x128xf32>
    %cst = arith.constant dense<0xFF800000> : vector<1x2x128xf32>
    %1 = vector.multi_reduction <maximumf>, %0, %cst [1] : vector<1x4x2x128xf32> to vector<1x2x128xf32>
    %2 = vector.shape_cast %1 : vector<1x2x128xf32> to vector<1x1x2x128xf32>
    %c0_3 = arith.constant 0 : index
    %c0_4 = arith.constant 0 : index
    %c0_5 = arith.constant 0 : index
    %c0_6 = arith.constant 0 : index
    %3 = vector.load %arg3[%c0_3, %c0_4, %c0_5, %c0_6] : memref<1x1x2x128xf32, #tpu.memory_space<vmem>>, vector<1x1x2x128xf32>
    tpu.vector_store %arg3[%c0_3, %c0_4, %c0_5, %c0_6], %2 {strides = array<i32>} : memref<1x1x2x128xf32, #tpu.memory_space<vmem>>, vector<1x1x2x128xf32>,
    return
  }
  func.func @transform_0(%arg0: i32, %arg1: i32) -> (i32, i32, i32, i32) {
    %c0_i32 = arith.constant 0 : i32
    %c0_i32_0 = arith.constant 0 : i32
    %c0_i32_1 = arith.constant 0 : i32
    return %arg0, %c0_i32, %arg1, %c0_i32_0 : i32, i32, i32, i32
  }
  func.func @transform_1(%arg0: i32, %arg1: i32) -> (i32, i32, i32, i32) {
    %c0_i32 = arith.constant 0 : i32
    %c0_i32_0 = arith.constant 0 : i32
    %c0_i32_1 = arith.constant 0 : i32
    return %arg0, %c0_i32, %arg1, %c0_i32_0 : i32, i32, i32, i32
  }
}

</mosaic_0001>

<llo_original>
// kernel: tpu_custom_call.1
$region0: #{tpu_custom_call.1}
  #allocation0 [shape = 'u32[]', space=smem, size = 0x4, offset = 0x4, fixed_abs, tag = 'smem constant byte address 0x4 - core index']
  #allocation1 [shape = 'u32[72,128]{1,0:T(1,128)}', space=vmem, size = 0x9000, scoped, tag = 'internal scratch']
  %s0 = inlined_call_operand.hbm [shape: f32[2,4,2,128], index: 0, kind: input, shape index: {}]
  %s1 = inlined_call_operand.hbm [shape: f32[2,1,2,128], index: 1, kind: output, shape index: {}]
  %s2 = sld [smem:[#allocation0]]
  $region41: #{tpu_custom_call.1} parent=0
    _
  %s4 = ssub.s32 1, %s2
  %s5 = scalar_select 0, %s4, %s2
  $region1: #{tpu_custom_call.1} parent=0
    #allocation2 [shape = 'u8[8192]{0}', space=vmem, size = 0x2000, scoped, tag = 'input window, operand 0']
    #allocation3 [shape = 's32[2]{0}', space=sflag, size = 0x8, scoped, tag = 'scoped memory for tpu_custom_call.1']
    #allocation4 [shape = 's32[2]{0}', space=sflag, size = 0x8, scoped, tag = 'scoped memory for tpu_custom_call.1']
    #allocation5 [shape = 'u8[2048]{0}', space=vmem, size = 0x800, scoped, tag = 'output window, operand 0']
    %6 = vsyncpa [#allocation3], 0
    %s7 = scalar_lea.sflag [#allocation3], 1
    %8 = vsyncpa %s7, 0
    %9 = vsyncpa [#allocation4], 0
    %s10 = scalar_lea.sflag [#allocation4], 1
    %11 = vsyncpa %s10, 0
    loop: start=0, step=1, limit=4
    $region2: #{tpu_custom_call.1} parent=1 // loop_pre_header
      _
    $region3: #{tpu_custom_call.1} parent=1 // loop_header
      %s13 = sphi 0, %s17
      %p14 = scmp.ge.s32.totalorder %s13, 4
      %s20 = sphi 0, %s32
      %s21 = sphi 0, %s28
      %s22 = sphi 0, %s20
      %s23 = sphi 0, %s21
      %s24 = sphi 0, %s22
      %s25 = sphi 0, %s23
      %s37 = sphi 0, %s39
      %s40 = sphi 0, %s37
      %s41 = sphi 0, %s40
      %s57 = sphi 0, %s41
      %s65 = sphi 0, %s67
      %s68 = sphi 0, %s65
      %s69 = sphi 0, %s68
      %s85 = sphi 0, %s69
    $region4: #{tpu_custom_call.1} parent=1 // loop_header_branch
      %16 = sbr.rel (%p14) target = $region8
    $region5: #{tpu_custom_call.1} parent=1 // loop_body
      %s18 = ssub.s32 %s13, 1
      %s19 = ssub.s32 %s13, 2
      %s26 = sadd.s32 1, %s21
      %p27 = scmp.ge.s32.totalorder %s26, 1
      %s28 = scalar_select %p27, 0, %s26
      %s29 = sadd.s32 1, %s20
      %s30 = scalar_select %p27, %s29, %s20
      %p31 = scmp.ge.s32.totalorder %s30, 2
      %s32 = scalar_select %p31, 0, %s30
      %s33 = ssub.s32 %s20, %s32
      %s34 = ssub.s32 %s21, %s28
      %s35 = sor.u32 %s33, %s34
      %p36 = scmp.eq.s32.totalorder %s35, 0
      %s38 = sadd.s32 %s37, 1
      %s39 = scalar_select %p36, %s37, %s38
      %p42 = pneg %p36
      %p43 = scmp.eq.s32.totalorder %s13, 1
      %p44 = por %p42, %p43
      %p45 = scmp.ne.s32.totalorder %s37, %s40
      %p46 = scmp.eq.s32.totalorder %s13, 0
      %p47 = por %p45, %p46
      %p48 = scmp.ne.s32.totalorder %s37, %s40
      %p49 = scmp.eq.s32.totalorder %s18, 1
      %p50 = por %p48, %p49
      %p51 = scmp.ne.s32.totalorder %s40, %s41
      %p52 = scmp.eq.s32.totalorder %s18, 0
      %p53 = por %p51, %p52
      %p54 = scmp.ne.s32.totalorder %s40, %s41
      %p55 = scmp.eq.s32.totalorder %s19, 1
      %p56 = por %p54, %p55
      %p58 = scmp.ne.s32.totalorder %s41, %s57
      %p59 = scmp.eq.s32.totalorder %s19, 0
      %p60 = por %p58, %p59
      %s61 = ssub.s32 %s20, %s32
      %s62 = ssub.s32 %s21, %s28
      %s63 = sor.u32 %s61, %s62
      %p64 = scmp.eq.s32.totalorder %s63, 0
      %s66 = sadd.s32 %s65, 1
      %s67 = scalar_select %p64, %s65, %s66
      %p70 = pneg %p64
      %p71 = scmp.eq.s32.totalorder %s13, 1
      %p72 = por %p70, %p71
      %p73 = scmp.ne.s32.totalorder %s65, %s68
      %p74 = scmp.eq.s32.totalorder %s13, 0
      %p75 = por %p73, %p74
      %p76 = scmp.ne.s32.totalorder %s65, %s68
      %p77 = scmp.eq.s32.totalorder %s18, 1
      %p78 = por %p76, %p77
      %p79 = scmp.ne.s32.totalorder %s68, %s69
      %p80 = scmp.eq.s32.totalorder %s18, 0
      %p81 = por %p79, %p80
      %p82 = scmp.ne.s32.totalorder %s68, %s69
      %p83 = scmp.eq.s32.totalorder %s19, 1
      %p84 = por %p82, %p83
      %p86 = scmp.ne.s32.totalorder %s69, %s85
      %p87 = scmp.eq.s32.totalorder %s19, 0
      %p88 = por %p86, %p87
      %p89 = scmp.le.s32.totalorder 1, %s13
      %p90 = scmp.lt.s32.totalorder %s13, 3
      %p91 = pnand %p89, %p90
      %p92 = pneg %p91
      // Predicated region
      $region9: #{tpu_custom_call.1} parent=5 // pred_check
        _
      $region10: #{tpu_custom_call.1} parent=5 // pred_check_branch
        %94 = sbr.rel (%p91) target = $region12
      $region11: #{tpu_custom_call.1} parent=5 // pred_region
        %s95 = ssub.s32 %s13, 1
      $region12: #{tpu_custom_call.1} parent=5 // pred_fallthru
        _
      %p96 = scmp.lt.s32.totalorder %s13, 2
      // Predicated region
      $region13: #{tpu_custom_call.1} parent=5 // pred_check
        %p97 = pneg %p96
      $region14: #{tpu_custom_call.1} parent=5 // pred_check_branch
        %99 = sbr.rel (%p97) target = $region16
      $region15: #{tpu_custom_call.1} parent=5 // pred_region
        // Predicated region
        $region17: #{tpu_custom_call.1} parent=15 // pred_check
          %p100 = pneg %p47
        $region18: #{tpu_custom_call.1} parent=15 // pred_check_branch
          %102 = sbr.rel (%p100) target = $region20
        $region19: #{tpu_custom_call.1} parent=15 // pred_region
          %s103 = sand.u32 %s37, 1
          %s104 = scalar_lea.sflag [#allocation3], %s103
          %s105 = sand.u32 %s37, 1
          %s106 = smul.addr %s105, 8
          %s107 = scalar_lea.vmem [#allocation2], %s106
          %109 = vsyncadd %s104, 0
          %s110 = smul.addr %s20, 4
          %s111 = sadd.s32 %s21, %s110
          %s112 = smul.addr %s111, 2
          %s113 = scalar_lea.hbm %s0, %s112
          %s114 = sshll.u32 %s113, 4
          %s115 = int_to_ptr.hbm [resolvable:$true] %s114
          %s116 = sshll.u32 %s107, 4
          %s117 = int_to_ptr.vmem [resolvable:$true] %s116
          %122 = dma.hbm_to_vmem [thread:$0]  %s115, 128, %s117, %s104, 32, 32, 2
        $region20: #{tpu_custom_call.1} parent=15 // pred_fallthru
          _
      $region16: #{tpu_custom_call.1} parent=5 // pred_fallthru
        _
      %p123 = scmp.le.s32.totalorder 1, %s13
      %p124 = scmp.lt.s32.totalorder %s13, 3
      %p125 = pnand %p123, %p124
      %p126 = pneg %p125
      // Predicated region
      $region21: #{tpu_custom_call.1} parent=5 // pred_check
        _
      $region22: #{tpu_custom_call.1} parent=5 // pred_check_branch
        %128 = sbr.rel (%p125) target = $region24
      $region23: #{tpu_custom_call.1} parent=5 // pred_region
        %s129 = ssub.s32 %s13, 1
        %s130 = sand.u32 %s40, 1
        %s131 = scalar_lea.sflag [#allocation3], %s130
        %s132 = sand.u32 %s40, 1
        %s133 = smul.addr %s132, 8
        %s134 = scalar_lea.vmem [#allocation2], %s133
        // Predicated region
        $region25: #{tpu_custom_call.1} parent=23 // pred_check
          %p135 = pneg %p53
        $region26: #{tpu_custom_call.1} parent=23 // pred_check_branch
          %137 = sbr.rel (%p135) target = $region28
        $region27: #{tpu_custom_call.1} parent=23 // pred_region
          %139 = dma.done %s131, 128
        $region28: #{tpu_custom_call.1} parent=23 // pred_fallthru
          _
        %s140 = sand.u32 %s40, 1
        %s141 = scalar_lea.sflag [#allocation3], %s140
        %s142 = sand.u32 %s40, 1
        %s143 = smul.addr %s142, 8
        %s144 = scalar_lea.vmem [#allocation2], %s143
        %p145 = pneg %p53
        %p146 = pneg %p50
        %p147 = pneg %p81
        %p148 = pneg %p78
        %s149 = sand.u32 %s68, 1
        %s150 = scalar_lea.sflag [#allocation4], %s149
        %s151 = sand.u32 %s68, 1
        %s152 = smul.addr %s151, 2
        %s153 = scalar_lea.vmem [#allocation5], %s152
        %v154 = vld [vmem:[%s134] sm:$0x3]
        %v155 = vld [vmem:[%s134 + $0x2] sm:$0x3]
        %v156 = vld [vmem:[%s134 + $0x4] sm:$0x3]
        %v157 = vld [vmem:[%s134 + $0x6] sm:$0x3]
        %vm158 = vcmask 1041408
        %v159 = vsel %vm158, %v154, -inf
        %v160 = vsel %vm158, %v155, -inf
        %v161 = vsel %vm158, %v156, -inf
        %v162 = vsel %vm158, %v157, -inf
        %v163 = vmax.f32 %v159, %v160
        %v164 = vmax.f32 %v161, %v162
        %v165 = vmax.f32 %v163, %v164
        %166 = vst [vmem:[%s153] sm:$0x3] %v165
        %s167 = sand.u32 %s68, 1
        %s168 = scalar_lea.sflag [#allocation4], %s167
        %s169 = sand.u32 %s68, 1
        %s170 = smul.addr %s169, 2
        %s171 = scalar_lea.vmem [#allocation5], %s170
        // Predicated region
        $region29: #{tpu_custom_call.1} parent=23 // pred_check
          %p172 = pneg %p78
        $region30: #{tpu_custom_call.1} parent=23 // pred_check_branch
          %174 = sbr.rel (%p172) target = $region32
        $region31: #{tpu_custom_call.1} parent=23 // pred_region
          %176 = vsyncadd %s168, 0
          %s177 = sadd.s32 %s23, %s22
          %s178 = smul.addr %s177, 2
          %s179 = scalar_lea.hbm %s1, %s178
          %s181 = sshll.u32 %s171, 4
          %s182 = int_to_ptr.vmem [resolvable:$true] %s181
          %s183 = sshll.u32 %s179, 4
          %s184 = int_to_ptr.hbm [resolvable:$true] %s183
          %186 = dma.vmem_to_hbm [thread:$0]  %s182, 32, %s184, %s168
        $region32: #{tpu_custom_call.1} parent=23 // pred_fallthru
          _
      $region24: #{tpu_custom_call.1} parent=5 // pred_fallthru
        _
      %p187 = scmp.le.s32.totalorder 2, %s13
      // Predicated region
      $region33: #{tpu_custom_call.1} parent=5 // pred_check
        %p188 = pneg %p187
      $region34: #{tpu_custom_call.1} parent=5 // pred_check_branch
        %190 = sbr.rel (%p188) target = $region36
      $region35: #{tpu_custom_call.1} parent=5 // pred_region
        %s191 = ssub.s32 %s13, 2
        // Predicated region
        $region37: #{tpu_custom_call.1} parent=35 // pred_check
          %p192 = pneg %p84
        $region38: #{tpu_custom_call.1} parent=35 // pred_check_branch
          %194 = sbr.rel (%p192) target = $region40
        $region39: #{tpu_custom_call.1} parent=35 // pred_region
          %s195 = sand.u32 %s69, 1
          %s196 = scalar_lea.sflag [#allocation4], %s195
          %s197 = sand.u32 %s69, 1
          %s198 = smul.addr %s197, 2
          %s199 = scalar_lea.vmem [#allocation5], %s198
          %201 = dma.done %s196, 32
        $region40: #{tpu_custom_call.1} parent=35 // pred_fallthru
          _
      $region36: #{tpu_custom_call.1} parent=5 // pred_fallthru
        _
    $region6: #{tpu_custom_call.1} parent=1 // loop_footer
      %s17 = sadd.s32 1, %s13
    $region7: #{tpu_custom_call.1} parent=1 // loop_footer_branch
      %12 = sbr.rel target = $region3
    $region8: #{tpu_custom_call.1} parent=1 // loop_exit
      _
    %202 = vsyncpa [#allocation3], 1
    %s203 = scalar_lea.sflag [#allocation3], 1
    %204 = vsyncpa %s203, 1
    %205 = vsyncpa [#allocation4], 1
    %s206 = scalar_lea.sflag [#allocation4], 1
    %207 = vsyncpa %s206, 1

</llo_original>
